<compile_context>
chip_gen: v6e
topology: v6e:2x2x1
jax: 0.10.0
libtpu: 0.0.40
codegen_flags: <defaults>
</compile_context>

<pallas_src>
from functools import partial

import jax
import jax.numpy as jnp
from jax.experimental import pallas as pl
from jax.experimental.pallas import tpu as pltpu


def _attention_mask_kernel(x_ref, o_ref, *, scale):
    # x_ref / o_ref: (TR, HW) tile in VMEM (last dim = full H*W extent).
    x = x_ref[...].astype(jnp.float32)
    # Per-row spatial sum in f32 over the lane axis.
    xsum = jnp.sum(x, axis=-1, keepdims=True)                      # (TR, 1)
    # One reciprocal per row, then a single broadcast multiply in f32.
    factor = scale * pl.reciprocal(xsum, approx=False)             # (TR, 1)
    o_ref[...] = (x * factor).astype(o_ref.dtype)


def _attention_mask_ref(x):
    """Plain-XLA fallback / reference (identical semantics)."""
    xsum = jnp.sum(x, axis=(2, 3), keepdims=True)
    return x / xsum * (x.shape[2] * x.shape[3] * 0.5)


def _vmem_capacity_bytes():
    """Best-effort per-core VMEM capacity; conservative default if unknown."""
    try:
        info = pltpu.get_tpu_info()
        cap = getattr(info, "vmem_capacity_bytes", None)
        if cap:
            return int(cap)
    except Exception:
        pass
    return 64 * 1024 * 1024  # v7x per-TC; safe lower bound everywhere


def attention_mask(x, *, force_pallas=False):
    """x: (N, C, H, W) -> (N, C, H, W), matching the PyTorch forward."""
    N, C, H, W = x.shape
    rows, hw = N * C, H * W
    itemsize = jnp.dtype(x.dtype).itemsize
    total_bytes = rows * hw * itemsize

    # Tiny tensors: fixed pallas_call launch cost dominates -> plain XLA.
    if not force_pallas and total_bytes < 512 * 1024:
        return _attention_mask_ref(x)

    # Sublane quantum for this dtype (8 for f32, 16 for bf16, 32 for 8-bit).
    sub = {4: 8, 2: 16, 1: 32}.get(itemsize, 8)

    # VMEM-layout bytes per row (lanes round up to 128) for footprint math.
    hw_vmem = pl.cdiv(hw, 128) * 128
    row_vmem_bytes = hw_vmem * itemsize

    # Generation-dependent budget: v7x (64 MiB VMEM) -> 48 MiB limit / 8 MiB
    # tiles; v5e/v6e (128 MiB) -> 96 MiB limit / 16 MiB tiles.  Double-buffered
    # in+out footprint (4 buffers) then sits at ~2/3 of the requested limit.
    vmem_cap = _vmem_capacity_bytes()
    vmem_limit = int(min(vmem_cap * 3 // 4, 96 * 1024 * 1024))
    target_tile_bytes = max(1 << 20, vmem_limit // 6)

    # Largest row tile whose 4-buffer footprint fits the VMEM limit.
    max_tr_vmem = (vmem_limit // (4 * row_vmem_bytes)) // sub * sub

    if rows <= sub:
        tr = rows  # block dim == full array dim (always a legal block shape)
        if 4 * tr * row_vmem_bytes > vmem_limit:
            # Degenerate: even one minimum-height tile overflows VMEM
            # (very large H*W).
            # TODO(synk): lane-chunked two-pass Pallas kernel; XLA handles it.
            return _attention_mask_ref(x)
    else:
        if max_tr_vmem < sub:
            # Degenerate huge-H*W case (see above).
            # TODO(synk): lane-chunked two-pass Pallas kernel; XLA handles it.
            return _attention_mask_ref(x)
        tr = max(sub, (target_tile_bytes // row_vmem_bytes) // sub * sub)
        if rows >= 4 * sub:
            # Keep >= ~4 grid steps: gives the DMA pipeline work to overlap
            # and lets v7x shard the parallel axis across both TensorCores.
            tr = min(tr, max(sub, (rows // 4) // sub * sub))
        tr = min(tr, (rows // sub) * sub, max_tr_vmem)

    grid = (pl.cdiv(rows, tr),)
    scale = float(H) * float(W) * 0.5

    out2d = pl.pallas_call(
        partial(_attention_mask_kernel, scale=scale),
        out_shape=jax.ShapeDtypeStruct((rows, hw), x.dtype),
        grid_spec=pltpu.PrefetchScalarGridSpec(
            num_scalar_prefetch=0,
            grid=grid,
            # Last block dim equals the full array dim -> no lane padding
            # needed; a non-dividing row count yields a Pallas-masked tail
            # block (those rows are never stored).
            in_specs=[pl.BlockSpec((tr, hw), lambda i: (i, 0))],
            out_specs=pl.BlockSpec((tr, hw), lambda i: (i, 0)),
        ),
        compiler_params=pltpu.CompilerParams(
            # Row tiles are fully independent -> shard across TensorCores
            # (2 TCs on v7x; harmless on v5e/v6e).
            dimension_semantics=("parallel",),
            vmem_limit_bytes=vmem_limit,
        ),
        cost_estimate=pl.CostEstimate(
            flops=2 * rows * hw,
            transcendentals=rows,
            bytes_accessed=2 * rows * hw * itemsize,
        ),
    )(x.reshape(rows, hw))

    return out2d.reshape(N, C, H, W)


if __name__ == "__main__":
    key = jax.random.PRNGKey(0)
    k1, k2, k3 = jax.random.split(key, 3)
    checks = []

    # 1) Small NCHW shape typical of this module; force the Pallas path so the
    #    kernel itself is exercised (default dispatch would use the XLA path
    #    for something this tiny).  Positive values avoid the 0-sum case.
    x1 = jax.random.uniform(k1, (2, 4, 16, 16), dtype=jnp.float32) + 0.1
    out1 = attention_mask(x1, force_pallas=True)
    jax.block_until_ready(out1)
    checks.append((out1, _attention_mask_ref(x1)))

    # 2) H*W not a multiple of 128 and N*C not a multiple of the row tile:
    #    exercises masked lane tail + Pallas partial tail block (no pad/slice).
    x2 = jax.random.uniform(k2, (3, 5, 12, 12), dtype=jnp.float32) + 0.1
    out2 = attention_mask(x2, force_pallas=True)
    jax.block_until_ready(out2)
    checks.append((out2, _attention_mask_ref(x2)))

    # 3) Large enough to take the Pallas path by default with a multi-step
    #    parallel grid (4 row tiles of 16 rows each).
    x3 = jax.random.uniform(k3, (4, 16, 64, 64), dtype=jnp.float32) + 0.1
    out3 = attention_mask(x3)
    jax.block_until_ready(out3)
    checks.append((out3, _attention_mask_ref(x3)))

    for out, ref in checks:
        assert out.shape == ref.shape
        assert jnp.allclose(out, ref, atol=1e-5, rtol=1e-4), "mismatch vs reference"

    print("KERNEL_OK")
</pallas_src>

<mosaic_0001>
module attributes {stable_mosaic.version = 11 : i64} {
  func.func @_attention_mask_kernel(%arg0: i32, %arg1: memref<8x256xf32, #tpu.memory_space<vmem>>, %arg2: memref<8x256xf32, #tpu.memory_space<vmem>>) attributes {dimension_semantics = [#tpu.dimension_semantics<parallel>], iteration_bounds = array<i64: 1>, scalar_prefetch = 0 : i64, scratch_operands = 0 : i64, tpu.core_type = #tpu.core_type<tc>, window_params = [{transform_indices = @transform_0, window_bounds = array<i64: 8, 256>}, {transform_indices = @transform_1, window_bounds = array<i64: 8, 256>}]} {
    %c0 = arith.constant 0 : index
    %c0_0 = arith.constant 0 : index
    %0 = vector.load %arg1[%c0, %c0_0] : memref<8x256xf32, #tpu.memory_space<vmem>>, vector<8x256xf32>
    %cst = arith.constant dense<0.000000e+00> : vector<8xf32>
    %1 = vector.multi_reduction <add>, %0, %cst [1] : vector<8x256xf32> to vector<8xf32>
    %2 = vector.shape_cast %1 : vector<8xf32> to vector<8x1xf32>
    %3 = tpu.reciprocal %2 : vector<8x1xf32> -> vector<8x1xf32>
    %cst_1 = arith.constant 1.280000e+02 : f32
    %4 = vector.broadcast %cst_1 : f32 to vector<8x1xf32>
    %5 = arith.mulf %4, %3 : vector<8x1xf32>
    %6 = vector.broadcast %5 : vector<8x1xf32> to vector<8x256xf32>
    %7 = arith.mulf %0, %6 : vector<8x256xf32>
    %c0_2 = arith.constant 0 : index
    %c0_3 = arith.constant 0 : index
    %8 = vector.load %arg2[%c0_2, %c0_3] : memref<8x256xf32, #tpu.memory_space<vmem>>, vector<8x256xf32>
    tpu.vector_store %arg2[%c0_2, %c0_3], %7 {strides = array<i32>} : memref<8x256xf32, #tpu.memory_space<vmem>>, vector<8x256xf32>,
    return
  }
  func.func @transform_0(%arg0: i32) -> (i32, i32) {
    %c0_i32 = arith.constant 0 : i32
    %c0_i32_0 = arith.constant 0 : i32
    return %arg0, %c0_i32 : i32, i32
  }
  func.func @transform_1(%arg0: i32) -> (i32, i32) {
    %c0_i32 = arith.constant 0 : i32
    %c0_i32_0 = arith.constant 0 : i32
    return %arg0, %c0_i32 : i32, i32
  }
}

</mosaic_0001>

<llo_original>
// kernel: tpu_custom_call.1
$region0: #{tpu_custom_call.1}
  #allocation0 [shape = 'u32[]', space=smem, size = 0x4, offset = 0x4, fixed_abs, tag = 'smem constant byte address 0x4 - core index']
  #allocation1 [shape = 'u32[144,128]{1,0:T(1,128)}', space=vmem, size = 0x12000, scoped, tag = 'internal scratch']
  %s0 = inlined_call_operand.hbm [shape: f32[8,256], index: 0, kind: input, shape index: {}]
  %s1 = inlined_call_operand.hbm [shape: f32[8,256], index: 1, kind: output, shape index: {}]
  %s2 = sld [smem:[#allocation0]]
  $region18: #{tpu_custom_call.1} parent=0
    _
  %s4 = ssub.s32 1, %s2
  %s5 = scalar_select 0, %s4, %s2
  $region1: #{tpu_custom_call.1} parent=0
    #allocation2 [shape = 'u8[8192]{0}', space=vmem, size = 0x2000, scoped, tag = 'input window, operand 0, single buffered']
    #allocation3 [shape = 's32[1]{0}', space=sflag, size = 0x4, scoped, tag = 'scoped memory for tpu_custom_call.1']
    #allocation4 [shape = 's32[1]{0}', space=sflag, size = 0x4, scoped, tag = 'scoped memory for tpu_custom_call.1']
    #allocation5 [shape = 'u8[8192]{0}', space=vmem, size = 0x2000, scoped, tag = 'output window, operand 0, single buffered']
    %6 = vsyncpa [#allocation3], 0
    %7 = vsyncpa [#allocation4], 0
    // Predicated region
    $region2: #{tpu_custom_call.1} parent=1 // pred_check
      _
    $region3: #{tpu_custom_call.1} parent=1 // pred_check_branch
      %9 = sbr.rel (0) target = $region5
    $region4: #{tpu_custom_call.1} parent=1 // pred_region
      %s11 = ssub.s32 256, 256
      %12 = vsyncadd [#allocation3], %s11
      %s14 = sshll.u32 [#allocation2], 4
      %s15 = int_to_ptr.vmem [resolvable:$true] %s14
      %17 = dma.hbm_to_vmem [thread:$0]  %s0, 256, %s15, [#allocation3]
    $region5: #{tpu_custom_call.1} parent=1 // pred_fallthru
      _
    // Predicated region
    $region6: #{tpu_custom_call.1} parent=1 // pred_check
      _
    $region7: #{tpu_custom_call.1} parent=1 // pred_check_branch
      %19 = sbr.rel (0) target = $region9
    $region8: #{tpu_custom_call.1} parent=1 // pred_region
      %20 = dma.done [#allocation3], 256
    $region9: #{tpu_custom_call.1} parent=1 // pred_fallthru
      _
    %v21 = vld [vmem:[#allocation2] sm:$0xff]
    %v22 = vld [vmem:[#allocation2 + $0x8] sm:$0xff]
    %v23 = vadd.f32 %v21, %v22
    %24 = vadd.xlane.f32.xlu0 %v23
    %v25 = vpop.xlane.xlu0 %24
    %v26 = vrcp.pop %v25
    %v27 = vmul.f32 %v26, 128.0
    %v28 = vmul.f32 %v21, %v27
    %v29 = vmul.f32 %v22, %v27
    %30 = vst [vmem:[#allocation5] sm:$0xff] %v28
    %31 = vst [vmem:[#allocation5 + $0x8] sm:$0xff] %v29
    // Predicated region
    $region10: #{tpu_custom_call.1} parent=1 // pred_check
      _
    $region11: #{tpu_custom_call.1} parent=1 // pred_check_branch
      %33 = sbr.rel (0) target = $region13
    $region12: #{tpu_custom_call.1} parent=1 // pred_region
      %s35 = ssub.s32 256, 256
      %36 = vsyncadd [#allocation4], %s35
      %s38 = sshll.u32 [#allocation5], 4
      %s39 = int_to_ptr.vmem [resolvable:$true] %s38
      %41 = dma.vmem_to_hbm [thread:$0]  %s39, 256, %s1, [#allocation4]
    $region13: #{tpu_custom_call.1} parent=1 // pred_fallthru
      _
    // Predicated region
    $region14: #{tpu_custom_call.1} parent=1 // pred_check
      _
    $region15: #{tpu_custom_call.1} parent=1 // pred_check_branch
      %43 = sbr.rel (0) target = $region17
    $region16: #{tpu_custom_call.1} parent=1 // pred_region
      %44 = dma.done [#allocation4], 256
    $region17: #{tpu_custom_call.1} parent=1 // pred_fallthru
      _
    %45 = vsyncpa [#allocation3], 1
    %46 = vsyncpa [#allocation4], 1

</llo_original>
